<compile_context>
chip_gen: v6e
topology: v6e:2x2x1
jax: 0.10.0
libtpu: 0.0.40
codegen_flags: <defaults>
</compile_context>

<pallas_src>
import functools
import math

import jax
import jax.numpy as jnp
from jax.experimental import pallas as pl
from jax.experimental.pallas import tpu as pltpu


# ---------------------------------------------------------------------------
# Kernel: one tile of (packed) atom rows x resident weight -> output tile.
# ---------------------------------------------------------------------------
def _atomwise_linear_kernel(x_ref, w_ref, o_ref):
    o_ref[...] = jnp.dot(
        x_ref[...], w_ref[...], preferred_element_type=jnp.float32
    ).astype(o_ref.dtype)


# ---------------------------------------------------------------------------
# Helpers (trace-time Python).
# ---------------------------------------------------------------------------
def _round_up(x: int, m: int) -> int:
    return -(-x // m) * m


def _vmem_capacity_bytes() -> int:
    try:
        return int(pltpu.get_tpu_info().vmem_capacity_bytes)
    except Exception:
        return 64 * 1024 * 1024  # conservative fallback (v7x-sized)


def _select_packing(d_in: int, d_out: int, itemsize: int) -> int:
    """Smallest p giving a lane-dense (multiple-of-128) output row, bounded."""
    if d_out % 128 == 0:
        return 1
    p_exact = 128 // math.gcd(d_out, 128)   # (p*d_out) % 128 == 0
    p_fill = -(-128 // d_out)               # p*d_out >= 128 (fallback)
    for p in (p_exact, p_fill):
        if p <= 1:
            continue
        kk, nn = p * d_in, p * d_out
        w_dbuf_bytes = 2 * kk * nn * itemsize
        if kk <= 2048 and nn <= 2048 and w_dbuf_bytes <= 8 * 1024 * 1024:
            return p
    return 1  # unpacked fallback (masked partial stores, but always safe)


def _select_tile_rows(n_rows: int, bytes_per_row_dbuf: int, budget: int,
                      row_align: int = 16) -> int:
    if budget <= 0:
        max_rows = row_align
    else:
        max_rows = max(row_align, budget // max(1, bytes_per_row_dbuf))
    max_rows = max(row_align, (max_rows // row_align) * row_align)
    max_rows = min(max_rows, 8192)  # sanity cap; step overhead is ~0.35us

    if n_rows <= max_rows:
        if n_rows >= 4 * row_align:
            # Split into >= 2 "parallel" steps so both v7x TensorCores get work
            # (harmless ~0.35us extra on single-TC parts).
            tile = _round_up(pl.cdiv(n_rows, 2), row_align)
            return min(tile, max_rows)
        return n_rows  # full-extent block (allowed even if not 8/16-aligned)
    return max_rows


# ---------------------------------------------------------------------------
# Jitted wrapper: cast / pack / pallas_call / unpack all fuse in one program.
# ---------------------------------------------------------------------------
@functools.partial(jax.jit, static_argnames=("p", "compute_dtype", "out_dtype"))
def _atomwise_linear_packed(x, w_packed, *, p, compute_dtype, out_dtype):
    n_atoms, d_in = x.shape
    kk, nn = w_packed.shape
    assert kk == p * d_in, (kk, p, d_in)
    d_out = nn // p

    if compute_dtype is not None:
        x = x.astype(compute_dtype)
    in_itemsize = jnp.dtype(x.dtype).itemsize
    out_itemsize = jnp.dtype(out_dtype).itemsize

    # Pack p atoms per row (pad atom count to a multiple of p; tiny + fused).
    n_atoms_pad = _round_up(n_atoms, p)
    if n_atoms_pad != n_atoms:
        x = jnp.pad(x, ((0, n_atoms_pad - n_atoms), (0, 0)))
    n_rows = n_atoms_pad // p
    x_packed = x.reshape(n_rows, kk)

    # VMEM-budget-driven tiling (per generation via get_tpu_info).
    vmem_limit = (_vmem_capacity_bytes() * 3) // 4     # 48 MiB v7x, 96 MiB v5e/v6e
    w_vmem = 2 * kk * nn * in_itemsize                 # count weight double buffer
    slack = 4 * 1024 * 1024                            # Mosaic internal scratch etc.
    row_budget = vmem_limit - w_vmem - slack
    bytes_per_row_dbuf = 2 * (kk * in_itemsize + nn * out_itemsize)
    tile_rows = _select_tile_rows(n_rows, bytes_per_row_dbuf, row_budget)

    grid = (pl.cdiv(n_rows, tile_rows),)

    cost = pl.CostEstimate(
        flops=2 * n_rows * kk * nn,
        transcendentals=0,
        bytes_accessed=(n_rows * kk * in_itemsize
                        + kk * nn * in_itemsize
                        + n_rows * nn * out_itemsize),
    )

    out_packed = pl.pallas_call(
        _atomwise_linear_kernel,
        out_shape=jax.ShapeDtypeStruct((n_rows, nn), out_dtype),
        grid_spec=pl.GridSpec(
            grid=grid,
            in_specs=[
                pl.BlockSpec((tile_rows, kk), lambda i: (i, 0)),
                pl.BlockSpec((kk, nn), lambda i: (0, 0)),  # resident weight
            ],
            out_specs=pl.BlockSpec((tile_rows, nn), lambda i: (i, 0)),
        ),
        compiler_params=pltpu.CompilerParams(
            dimension_semantics=("parallel",),
            vmem_limit_bytes=vmem_limit,
        ),
        cost_estimate=cost,
    )(x_packed, w_packed)

    return out_packed.reshape(n_rows * p, d_out)[:n_atoms]


# ---------------------------------------------------------------------------
# Module wrapper: mirrors AtomwiseOperation.forward (dict in -> dict out).
# ---------------------------------------------------------------------------
class AtomwiseOperationPallas:
    """JAX/Pallas equivalent of nequip's AtomwiseOperation.

    `operation` is the per-atom linear map (e3nn o3.Linear-like on scalar
    irreps, path-normalized by 1/sqrt(fan_in)).  __call__ takes a data dict
    and replaces data[field] with operation(data[field]).
    """
    # TODO(synk): general e3nn tensor-product operations (non-scalar irreps)
    # are not implemented; only the linear / scalar-irreps hot path is.

    def __init__(self, field: str, d_in: int, d_out: int, key,
                 compute_dtype=None, out_dtype=None):
        self.field = field
        self.d_in, self.d_out = d_in, d_out
        self.compute_dtype = compute_dtype   # e.g. jnp.bfloat16 on v5e/v6e/v7x
        self.out_dtype = out_dtype           # None -> match input dtype

        w_raw = jax.random.normal(key, (d_in, d_out), dtype=jnp.float32)
        self.weight = w_raw / jnp.sqrt(jnp.float32(d_in))

        cdt = compute_dtype if compute_dtype is not None else jnp.float32
        self.p = _select_packing(d_in, d_out, jnp.dtype(cdt).itemsize)
        if self.p > 1:
            # Block-diagonal [p*d_in, p*d_out]: exact restatement of the
            # per-atom matmul on p concatenated atoms.  Built ONCE here.
            w_packed = jnp.kron(jnp.eye(self.p, dtype=jnp.float32), self.weight)
        else:
            w_packed = self.weight
        self.w_packed = jax.device_put(w_packed.astype(cdt))

    def __call__(self, data: dict) -> dict:
        data = dict(data)  # shallow copy, mirroring the PyTorch dict mutation
        x = data[self.field]
        out_dtype = jnp.dtype(self.out_dtype if self.out_dtype is not None
                              else x.dtype)
        data[self.field] = _atomwise_linear_packed(
            x, self.w_packed, p=self.p,
            compute_dtype=self.compute_dtype, out_dtype=out_dtype)
        return data


if __name__ == "__main__":
    key = jax.random.PRNGKey(0)
    k1, k2, k3, k4 = jax.random.split(key, 4)
    field = "node_features"

    # Case 1: fp32, nequip-like scalar features, non-multiple atom count
    # (exercises the pad-to-p / packed lane-dense path).  Exact check vs ref.
    num_atoms, d_in, d_out = 130, 32, 32
    feats = jax.random.normal(k1, (num_atoms, d_in), dtype=jnp.float32)
    data = {field: feats, "pos": jnp.zeros((num_atoms, 3), dtype=jnp.float32)}
    module = AtomwiseOperationPallas(field=field, d_in=d_in, d_out=d_out, key=k2)
    out = jax.block_until_ready(module(data)[field])
    ref = feats @ module.weight
    assert out.shape == (num_atoms, d_out), out.shape
    assert jnp.allclose(out, ref, atol=1e-5, rtol=1e-5)

    # Case 2: bf16 operands (f32 accumulation), multi-step grid with a ragged
    # final tile.  Looser tolerance since operands are bf16.
    n2, di2, do2 = 1000, 64, 16
    feats2 = jax.random.normal(k3, (n2, di2), dtype=jnp.float32)
    module2 = AtomwiseOperationPallas(field=field, d_in=di2, d_out=do2, key=k4,
                                      compute_dtype=jnp.bfloat16)
    out2 = jax.block_until_ready(module2({field: feats2})[field])
    ref2 = feats2 @ module2.weight
    assert out2.shape == (n2, do2), out2.shape
    assert jnp.allclose(out2, ref2, atol=3e-2, rtol=3e-2)

    print("KERNEL_OK")
</pallas_src>

<mosaic_0001>
module attributes {stable_mosaic.version = 11 : i64} {
  func.func @_atomwise_linear_kernel(%arg0: i32, %arg1: memref<33x128xf32, #tpu.memory_space<vmem>>, %arg2: memref<128x128xf32, #tpu.memory_space<vmem>>, %arg3: memref<33x128xf32, #tpu.memory_space<vmem>>) attributes {dimension_semantics = [#tpu.dimension_semantics<parallel>], iteration_bounds = array<i64: 1>, scalar_prefetch = 0 : i64, scratch_operands = 0 : i64, tpu.core_type = #tpu.core_type<tc>, window_params = [{transform_indices = @transform_0, window_bounds = array<i64: 33, 128>}, {pipeline_mode = #tpu.pipeline_mode<synchronous>, transform_indices = @transform_1, window_bounds = array<i64: 128, 128>}, {transform_indices = @transform_2, window_bounds = array<i64: 33, 128>}]} {
    %c0 = arith.constant 0 : index
    %c0_0 = arith.constant 0 : index
    %0 = vector.load %arg1[%c0, %c0_0] : memref<33x128xf32, #tpu.memory_space<vmem>>, vector<33x128xf32>
    %c0_1 = arith.constant 0 : index
    %c0_2 = arith.constant 0 : index
    %1 = vector.load %arg2[%c0_1, %c0_2] : memref<128x128xf32, #tpu.memory_space<vmem>>, vector<128x128xf32>
    %cst = arith.constant dense<0.000000e+00> : vector<33x128xf32>
    %2 = tpu.matmul %0, %1, %cst {dimension_numbers = #tpu.dot_dimension_numbers<[1], [0], [0], [1], [0, 0, 1, 1], [], []>} : vector<33x128xf32>, vector<128x128xf32>, vector<33x128xf32> -> vector<33x128xf32>
    %c0_3 = arith.constant 0 : index
    %c0_4 = arith.constant 0 : index
    %3 = vector.load %arg3[%c0_3, %c0_4] : memref<33x128xf32, #tpu.memory_space<vmem>>, vector<33x128xf32>
    tpu.vector_store %arg3[%c0_3, %c0_4], %2 {strides = array<i32>} : memref<33x128xf32, #tpu.memory_space<vmem>>, vector<33x128xf32>,
    return
  }
  func.func @transform_0(%arg0: i32) -> (i32, i32) {
    %c0_i32 = arith.constant 0 : i32
    %c0_i32_0 = arith.constant 0 : i32
    return %arg0, %c0_i32 : i32, i32
  }
  func.func @transform_1(%arg0: i32) -> (i32, i32) {
    %c0_i32 = arith.constant 0 : i32
    %c0_i32_0 = arith.constant 0 : i32
    %c0_i32_1 = arith.constant 0 : i32
    return %c0_i32, %c0_i32_0 : i32, i32
  }
  func.func @transform_2(%arg0: i32) -> (i32, i32) {
    %c0_i32 = arith.constant 0 : i32
    %c0_i32_0 = arith.constant 0 : i32
    return %arg0, %c0_i32 : i32, i32
  }
}

</mosaic_0001>

<llo_original>
// kernel: _atomwise_linear_packed.1
$region0: #{_atomwise_linear_packed.1}
  #allocation0 [shape = 'u32[]', space=smem, size = 0x4, offset = 0x4, fixed_abs, tag = 'smem constant byte address 0x4 - core index']
  #allocation1 [shape = 'u32[144,128]{1,0:T(1,128)}', space=vmem, size = 0x12000, scoped, tag = 'internal scratch']
  %s0 = inlined_call_operand.vmem [shape: f32[33,128], index: 0, kind: input, shape index: {}]
  %s1 = inlined_call_operand.vmem [shape: f32[128,128], index: 1, kind: input, shape index: {}]
  %s2 = inlined_call_operand.vmem [shape: f32[33,128], index: 2, kind: output, shape index: {}]
  %s3 = sld [smem:[#allocation0]]
  $region18: #{_atomwise_linear_packed.1} parent=0
    _
  %s5 = ssub.s32 1, %s3
  %s6 = scalar_select 0, %s5, %s3
  // Predicated region
  $region2: #{_atomwise_linear_packed.1} parent=0 // pred_check
    _
  $region3: #{_atomwise_linear_packed.1} parent=0 // pred_check_branch
    %8 = sbr.rel (0) target = $region5
  $region4: #{_atomwise_linear_packed.1} parent=0 // pred_region
    _
  $region5: #{_atomwise_linear_packed.1} parent=0 // pred_fallthru
    _
  // Predicated region
  $region6: #{_atomwise_linear_packed.1} parent=0 // pred_check
    _
  $region7: #{_atomwise_linear_packed.1} parent=0 // pred_check_branch
    %10 = sbr.rel (0) target = $region9
  $region8: #{_atomwise_linear_packed.1} parent=0 // pred_region
    _
  $region9: #{_atomwise_linear_packed.1} parent=0 // pred_fallthru
    _
  %v11 = vld [vmem:[%s0] sm:$0xff]
  %v12 = vld [vmem:[%s0 + $0x8] sm:$0xff]
  %v13 = vld [vmem:[%s0 + $0x10] sm:$0xff]
  %v14 = vld [vmem:[%s0 + $0x18] sm:$0xff]
  %v15 = vld [vmem:[%s0 + $0x20] sm:$0x1]
  %v16 = vld [vmem:[%s1] sm:$0xff]
  %v17 = vld [vmem:[%s1 + $0x8] sm:$0xff]
  %v18 = vld [vmem:[%s1 + $0x10] sm:$0xff]
  %v19 = vld [vmem:[%s1 + $0x18] sm:$0xff]
  %v20 = vld [vmem:[%s1 + $0x20] sm:$0xff]
  %v21 = vld [vmem:[%s1 + $0x28] sm:$0xff]
  %v22 = vld [vmem:[%s1 + $0x30] sm:$0xff]
  %v23 = vld [vmem:[%s1 + $0x38] sm:$0xff]
  %v24 = vld [vmem:[%s1 + $0x40] sm:$0xff]
  %v25 = vld [vmem:[%s1 + $0x48] sm:$0xff]
  %v26 = vld [vmem:[%s1 + $0x50] sm:$0xff]
  %v27 = vld [vmem:[%s1 + $0x58] sm:$0xff]
  %v28 = vld [vmem:[%s1 + $0x60] sm:$0xff]
  %v29 = vld [vmem:[%s1 + $0x68] sm:$0xff]
  %v30 = vld [vmem:[%s1 + $0x70] sm:$0xff]
  %v31 = vld [vmem:[%s1 + $0x78] sm:$0xff]
  %32 = vmatprep.subr.mxu0 0.0
  %33 = vmatpush1.msra.mxu0 %v31
  %34 = vmatprep.subr.mxu0 0.0
  %35 = vmatpush1.msra.mxu0 %v30
  %36 = vmatprep.subr.mxu0 0.0
  %37 = vmatpush1.msra.mxu0 %v29
  %38 = vmatprep.subr.mxu0 0.0
  %39 = vmatpush1.msra.mxu0 %v28
  %40 = vmatprep.subr.mxu0 0.0
  %41 = vmatpush1.msra.mxu0 %v27
  %42 = vmatprep.subr.mxu0 0.0
  %43 = vmatpush1.msra.mxu0 %v26
  %44 = vmatprep.subr.mxu0 0.0
  %45 = vmatpush1.msra.mxu0 %v25
  %46 = vmatprep.subr.mxu0 0.0
  %47 = vmatpush1.msra.mxu0 %v24
  %48 = vmatprep.subr.mxu0 0.0
  %49 = vmatpush1.msra.mxu0 %v23
  %50 = vmatprep.subr.mxu0 0.0
  %51 = vmatpush1.msra.mxu0 %v22
  %52 = vmatprep.subr.mxu0 0.0
  %53 = vmatpush1.msra.mxu0 %v21
  %54 = vmatprep.subr.mxu0 0.0
  %55 = vmatpush1.msra.mxu0 %v20
  %56 = vmatprep.subr.mxu0 0.0
  %57 = vmatpush1.msra.mxu0 %v19
  %58 = vmatprep.subr.mxu0 0.0
  %59 = vmatpush1.msra.mxu0 %v18
  %60 = vmatprep.subr.mxu0 0.0
  %61 = vmatpush1.msra.mxu0 %v17
  %62 = vmatprep.subr.mxu0 0.0
  %63 = vmatpush1.msra.mxu0 %v16
  %64 = vmatprep.subr.mxu0 0.0
  %65 = vmatpush2.msra.mxu0 0.0
  %66 = vmatprep.subr.mxu0 0.0
  %67 = vmatpush2.msra.mxu0 0.0
  %68 = vmatprep.subr.mxu0 0.0
  %69 = vmatpush2.msra.mxu0 0.0
  %70 = vmatprep.subr.mxu0 0.0
  %71 = vmatpush2.msra.mxu0 0.0
  %72 = vmatprep.subr.mxu0 0.0
  %73 = vmatpush2.msra.mxu0 0.0
  %74 = vmatprep.subr.mxu0 0.0
  %75 = vmatpush2.msra.mxu0 0.0
  %76 = vmatprep.subr.mxu0 0.0
  %77 = vmatpush2.msra.mxu0 0.0
  %78 = vmatprep.subr.mxu0 0.0
  %79 = vmatpush2.msra.mxu0 0.0
  %80 = vmatprep.subr.mxu0 0.0
  %81 = vmatpush2.msra.mxu0 0.0
  %82 = vmatprep.subr.mxu0 0.0
  %83 = vmatpush2.msra.mxu0 0.0
  %84 = vmatprep.subr.mxu0 0.0
  %85 = vmatpush2.msra.mxu0 0.0
  %86 = vmatprep.subr.mxu0 0.0
  %87 = vmatpush2.msra.mxu0 0.0
  %88 = vmatprep.subr.mxu0 0.0
  %89 = vmatpush2.msra.mxu0 0.0
  %90 = vmatprep.subr.mxu0 0.0
  %91 = vmatpush2.msra.mxu0 0.0
  %92 = vmatprep.subr.mxu0 0.0
  %93 = vmatpush2.msra.mxu0 0.0
  %94 = vmatprep.subr.mxu0 0.0
  %95 = vmatpush2.msra.mxu0 0.0
  %96 = vmatprep.mubr.f32.mxu0 0.0
  %97 = vmatmul.mubr.f32.gmra.mxu0 %v11
  %v98 = vpop.f32.mrf.mxu0
  %v99 = vadd.f32 0.0, %v98
  %v100 = vpop.f32.mrf.mxu0
  %101 = vmatprep.mubr.f32.mxu0 0.0
  %102 = vmatmul.mubr.f32.gmra.mxu0 %v12
  %v103 = vpop.f32.mrf.mxu0
  %v104 = vadd.f32 0.0, %v103
  %v105 = vpop.f32.mrf.mxu0
  %106 = vmatprep.mubr.f32.mxu0 0.0
  %107 = vmatmul.mubr.f32.gmra.mxu0 %v13
  %v108 = vpop.f32.mrf.mxu0
  %v109 = vadd.f32 0.0, %v108
  %v110 = vpop.f32.mrf.mxu0
  %111 = vmatprep.mubr.f32.mxu0 0.0
  %112 = vmatmul.mubr.f32.gmra.mxu0 %v14
  %v113 = vpop.f32.mrf.mxu0
  %v114 = vadd.f32 0.0, %v113
  %v115 = vpop.f32.mrf.mxu0
  %116 = vmatprep.mubr.f32.mxu0 0.0
  %117 = vmatmul.mubr.f32.gmra.mxu0 %v15
  %v118 = vpop.f32.mrf.mxu0
  %v119 = vadd.f32 0.0, %v118
  %v120 = vpop.f32.mrf.mxu0
  %121 = vdwg.mxu0
  %122 = vst [vmem:[%s2] sm:$0xff] %v99
  %123 = vst [vmem:[%s2 + $0x8] sm:$0xff] %v104
  %124 = vst [vmem:[%s2 + $0x10] sm:$0xff] %v109
  %125 = vst [vmem:[%s2 + $0x18] sm:$0xff] %v114
  %126 = vst [vmem:[%s2 + $0x20] sm:$0x1] %v119
  // Predicated region
  $region10: #{_atomwise_linear_packed.1} parent=0 // pred_check
    _
  $region11: #{_atomwise_linear_packed.1} parent=0 // pred_check_branch
    %128 = sbr.rel (0) target = $region13
  $region12: #{_atomwise_linear_packed.1} parent=0 // pred_region
    _
  $region13: #{_atomwise_linear_packed.1} parent=0 // pred_fallthru
    _
  // Predicated region
  $region14: #{_atomwise_linear_packed.1} parent=0 // pred_check
    _
  $region15: #{_atomwise_linear_packed.1} parent=0 // pred_check_branch
    %130 = sbr.rel (0) target = $region17
  $region16: #{_atomwise_linear_packed.1} parent=0 // pred_region
    _
  $region17: #{_atomwise_linear_packed.1} parent=0 // pred_fallthru
    _

</llo_original>
